<compile_context>
chip_gen: v7x
topology: tpu7x:2x2x1
jax: 0.10.0
libtpu: 0.0.40
codegen_flags: <defaults>
</compile_context>

<pallas_src>
import jax
import jax.numpy as jnp
from jax.experimental import pallas as pl
from jax.experimental.pallas import tpu as pltpu

_LANE = 128
_SUBLANE = 8


def _round_up(x, m):
    return ((x + m - 1) // m) * m


def _flatten_head_kernel(x_ref, w_ref, b_ref, o_ref):
    # x_ref: (TM, nf)  [streamed]   w_ref: (nf, N_pad)  [resident]
    # b_ref: (1, N_pad) [resident]  o_ref: (TM, N_pad)
    acc = jnp.dot(x_ref[...], w_ref[...], preferred_element_type=jnp.float32)
    acc = acc + b_ref[...].astype(jnp.float32)
    o_ref[...] = acc.astype(o_ref.dtype)


def prepare_flatten_head_params(weight, bias, compute_dtype=None):
    """One-time param prep (do this OUTSIDE the per-step hot path).

    weight: (target_window, nf)  -- PyTorch nn.Linear layout
    bias:   (target_window,)
    Returns:
      w_kernel: (nf, N_pad)  pre-transposed, lane-padded to a 128 multiple
      b_kernel: (1, N_pad)   f32
    """
    target_window, _nf = weight.shape
    n_pad = _round_up(target_window, _LANE)
    w = weight if compute_dtype is None else weight.astype(compute_dtype)
    b = bias
    if n_pad != target_window:
        w = jnp.pad(w, ((0, n_pad - target_window), (0, 0)))
        b = jnp.pad(b, ((0, n_pad - target_window),))
    w_kernel = w.T                                   # (nf, N_pad)
    b_kernel = b.reshape(1, n_pad).astype(jnp.float32)
    return w_kernel, b_kernel


def _choose_tm(m, nf, n_pad, in_itemsize, out_itemsize, vmem_budget_bytes):
    """Pick the M-tile so {resident weight + 2x input tile + 2x output tile} fits."""
    w_bytes = nf * n_pad * in_itemsize
    avail = max(vmem_budget_bytes - w_bytes, 2 << 20)
    per_row = 2 * (nf * in_itemsize + n_pad * out_itemsize)  # double-buffered
    tm = max(_SUBLANE, (avail // per_row) // _SUBLANE * _SUBLANE)
    tm = int(min(tm, 512))
    if m <= tm:
        return m          # single full-extent block (no (8,)-divisibility needed)
    return tm


def flatten_head_apply(x, w_kernel, b_kernel, target_window, *,
                       compute_dtype=None, vmem_budget_bytes=24 << 20):
    """Hot path. x: [bs, n_vars, d_model, patch_num]; params from prepare_flatten_head_params."""
    bs, n_vars, d_model, patch_num = x.shape
    nf = d_model * patch_num
    n_pad = w_kernel.shape[1]
    assert w_kernel.shape == (nf, n_pad), (w_kernel.shape, nf, n_pad)
    out_dtype = x.dtype

    # Flatten last two dims (row-major == torch.flatten(start_dim=-2)).
    x2d = x.reshape(bs * n_vars, nf)
    if compute_dtype is not None:
        x2d = x2d.astype(compute_dtype)
    m = bs * n_vars

    tm = _choose_tm(m, nf, n_pad, x2d.dtype.itemsize,
                    jnp.dtype(out_dtype).itemsize, vmem_budget_bytes)
    m_pad = _round_up(m, tm)
    if m_pad != m:
        x2d = jnp.pad(x2d, ((0, m_pad - m), (0, 0)))
    grid_m = m_pad // tm

    cost = pl.CostEstimate(
        flops=2 * m_pad * nf * n_pad,
        transcendentals=0,
        bytes_accessed=int(
            x2d.size * x2d.dtype.itemsize
            + w_kernel.size * w_kernel.dtype.itemsize
            + b_kernel.size * b_kernel.dtype.itemsize
            + m_pad * n_pad * jnp.dtype(out_dtype).itemsize),
    )

    out2d = pl.pallas_call(
        _flatten_head_kernel,
        out_shape=jax.ShapeDtypeStruct((m_pad, n_pad), out_dtype),
        grid_spec=pltpu.PrefetchScalarGridSpec(
            num_scalar_prefetch=0,
            grid=(grid_m,),
            in_specs=[
                pl.BlockSpec((tm, nf), lambda i: (i, 0)),      # x: streamed / pipelined
                pl.BlockSpec((nf, n_pad), lambda i: (0, 0)),   # weight: VMEM-resident
                pl.BlockSpec((1, n_pad), lambda i: (0, 0)),    # bias: VMEM-resident
            ],
            out_specs=pl.BlockSpec((tm, n_pad), lambda i: (i, 0)),
        ),
        compiler_params=pltpu.CompilerParams(
            dimension_semantics=("parallel",),   # v7x: shard M tiles across the 2 TCs
            vmem_limit_bytes=32 << 20,           # raise v5e's 16 MiB default scoped limit
        ),
        cost_estimate=cost,
    )(x2d, w_kernel, b_kernel)

    out2d = out2d[:m, :target_window]
    # TODO(synk): Dropout(head_dropout) is identity for p=0 / eval mode; training-mode
    # dropout would use pltpu.prng_seed + pltpu.stateful_bernoulli in-kernel.
    return out2d.reshape(bs, n_vars, target_window)


def flatten_head_forward(x, weight, bias, *, compute_dtype=None):
    """Convenience one-shot path (pays the weight pad/transpose per call)."""
    target_window = weight.shape[0]
    w_kernel, b_kernel = prepare_flatten_head_params(weight, bias, compute_dtype)
    return flatten_head_apply(x, w_kernel, b_kernel, target_window,
                              compute_dtype=compute_dtype)


if __name__ == "__main__":
    key = jax.random.PRNGKey(0)
    kx, kw, kb = jax.random.split(key, 3)

    # Small shapes consistent with the module.
    bs, n_vars, d_model, patch_num = 2, 4, 16, 8
    nf = d_model * patch_num          # 128
    target_window = 32                # not a 128 multiple -> exercises lane padding

    x = jax.random.normal(kx, (bs, n_vars, d_model, patch_num), dtype=jnp.float32)
    # nn.Linear(nf, target_window) parameter shapes.
    weight = jax.random.normal(kw, (target_window, nf), dtype=jnp.float32) * (1.0 / nf**0.5)
    bias = jax.random.normal(kb, (target_window,), dtype=jnp.float32) * 0.01

    # Preferred path: prep params once, then run the hot-path apply.
    w_kernel, b_kernel = prepare_flatten_head_params(weight, bias)
    out = flatten_head_apply(x, w_kernel, b_kernel, target_window)
    out = jax.block_until_ready(out)

    # Reference check in plain JAX.
    ref = x.reshape(bs, n_vars, nf) @ weight.T + bias
    assert out.shape == (bs, n_vars, target_window)
    assert jnp.allclose(out, ref, atol=1e-5, rtol=1e-5), float(jnp.max(jnp.abs(out - ref)))

    # Convenience path matches too.
    out2 = jax.block_until_ready(flatten_head_forward(x, weight, bias))
    assert jnp.allclose(out2, ref, atol=1e-5, rtol=1e-5)

    print("KERNEL_OK")
</pallas_src>

<mosaic_0001>
module attributes {stable_mosaic.version = 11 : i64} {
  func.func @_flatten_head_kernel(%arg0: i32, %arg1: memref<8x128xf32, #tpu.memory_space<vmem>>, %arg2: memref<128x128xf32, #tpu.memory_space<vmem>>, %arg3: memref<1x128xf32, #tpu.memory_space<vmem>>, %arg4: memref<8x128xf32, #tpu.memory_space<vmem>>) attributes {dimension_semantics = [#tpu.dimension_semantics<parallel>], iteration_bounds = array<i64: 1>, scalar_prefetch = 0 : i64, scratch_operands = 0 : i64, tpu.core_type = #tpu.core_type<tc>, window_params = [{transform_indices = @transform_0, window_bounds = array<i64: 8, 128>}, {pipeline_mode = #tpu.pipeline_mode<synchronous>, transform_indices = @transform_1, window_bounds = array<i64: 128, 128>}, {pipeline_mode = #tpu.pipeline_mode<synchronous>, transform_indices = @transform_2, window_bounds = array<i64: 1, 128>}, {transform_indices = @transform_3, window_bounds = array<i64: 8, 128>}]} {
    %c0 = arith.constant 0 : index
    %c0_0 = arith.constant 0 : index
    %0 = vector.load %arg1[%c0, %c0_0] : memref<8x128xf32, #tpu.memory_space<vmem>>, vector<8x128xf32>
    %c0_1 = arith.constant 0 : index
    %c0_2 = arith.constant 0 : index
    %1 = vector.load %arg2[%c0_1, %c0_2] : memref<128x128xf32, #tpu.memory_space<vmem>>, vector<128x128xf32>
    %cst = arith.constant dense<0.000000e+00> : vector<8x128xf32>
    %2 = tpu.matmul %0, %1, %cst {dimension_numbers = #tpu.dot_dimension_numbers<[1], [0], [0], [1], [0, 0, 1, 1], [], []>} : vector<8x128xf32>, vector<128x128xf32>, vector<8x128xf32> -> vector<8x128xf32>
    %c0_3 = arith.constant 0 : index
    %c0_4 = arith.constant 0 : index
    %3 = vector.load %arg3[%c0_3, %c0_4] : memref<1x128xf32, #tpu.memory_space<vmem>>, vector<1x128xf32>
    %4 = vector.broadcast %3 : vector<1x128xf32> to vector<8x128xf32>
    %5 = arith.addf %2, %4 : vector<8x128xf32>
    %c0_5 = arith.constant 0 : index
    %c0_6 = arith.constant 0 : index
    %6 = vector.load %arg4[%c0_5, %c0_6] : memref<8x128xf32, #tpu.memory_space<vmem>>, vector<8x128xf32>
    tpu.vector_store %arg4[%c0_5, %c0_6], %5 {strides = array<i32>} : memref<8x128xf32, #tpu.memory_space<vmem>>, vector<8x128xf32>,
    return
  }
  func.func @transform_0(%arg0: i32) -> (i32, i32) {
    %c0_i32 = arith.constant 0 : i32
    %c0_i32_0 = arith.constant 0 : i32
    return %arg0, %c0_i32 : i32, i32
  }
  func.func @transform_1(%arg0: i32) -> (i32, i32) {
    %c0_i32 = arith.constant 0 : i32
    %c0_i32_0 = arith.constant 0 : i32
    %c0_i32_1 = arith.constant 0 : i32
    return %c0_i32, %c0_i32_0 : i32, i32
  }
  func.func @transform_2(%arg0: i32) -> (i32, i32) {
    %c0_i32 = arith.constant 0 : i32
    %c0_i32_0 = arith.constant 0 : i32
    %c0_i32_1 = arith.constant 0 : i32
    return %c0_i32, %c0_i32_0 : i32, i32
  }
  func.func @transform_3(%arg0: i32) -> (i32, i32) {
    %c0_i32 = arith.constant 0 : i32
    %c0_i32_0 = arith.constant 0 : i32
    return %arg0, %c0_i32 : i32, i32
  }
}

</mosaic_0001>

<llo_original>
// kernel: tpu_custom_call.1
$region0: #{tpu_custom_call.1}
  #allocation0 [shape = 'u32[]', space=smem, size = 0x4, offset = 0x4, fixed_abs, tag = 'smem constant byte address 0x4 - core index']
  #allocation1 [shape = 'u32[144,128]{1,0:T(1,128)}', space=vmem, size = 0x12000, scoped, tag = 'internal scratch']
  %s0 = inlined_call_operand.hbm [shape: f32[8,128], index: 0, kind: input, shape index: {}]
  %s1 = inlined_call_operand.hbm [shape: f32[128,128], index: 1, kind: input, shape index: {}]
  %s2 = inlined_call_operand.vmem [shape: f32[1,128], index: 2, kind: input, shape index: {}]
  %s3 = inlined_call_operand.hbm [shape: f32[8,128], index: 3, kind: output, shape index: {}]
  %s4 = sld [smem:[#allocation0]]
  $region30: #{tpu_custom_call.1} parent=0
    _
  %s6 = ssub.s32 1, %s4
  %s7 = scalar_select 0, %s6, %s4
  $region1: #{tpu_custom_call.1} parent=0
    #allocation2 [shape = 'u8[4096]{0}', space=vmem, size = 0x1000, scoped, tag = 'input window, operand 0, single buffered']
    #allocation3 [shape = 's32[1]{0}', space=sflag, size = 0x4, scoped, tag = 'scoped memory for tpu_custom_call.1']
    #allocation4 [shape = 's32[1]{0}', space=sflag, size = 0x4, scoped, tag = 'scoped memory for tpu_custom_call.1']
    #allocation5 [shape = 'u8[65536]{0}', space=vmem, size = 0x10000, scoped, tag = 'input window, operand 1, single buffered']
    #allocation6 [shape = 's32[1]{0}', space=sflag, size = 0x4, scoped, tag = 'scoped memory for tpu_custom_call.1']
    #allocation7 [shape = 'u8[4096]{0}', space=vmem, size = 0x1000, scoped, tag = 'output window, operand 0, single buffered']
    %8 = vsyncpa [#allocation3], 0
    %9 = vsyncpa [#allocation6], 0
    %10 = vsyncpa [#allocation4], 0
    // Predicated region
    $region2: #{tpu_custom_call.1} parent=1 // pred_check
      _
    $region3: #{tpu_custom_call.1} parent=1 // pred_check_branch
      %12 = sbr.rel (0) target = $region5
    $region4: #{tpu_custom_call.1} parent=1 // pred_region
      %s14 = ssub.s32 128, 128
      %15 = vsyncadd [#allocation3], %s14
      %s17 = sshll.u32 [#allocation2], 4
      %s18 = int_to_ptr.vmem [resolvable:$true] %s17
      %20 = dma.hbm_to_vmem [thread:$0]  %s0, 128, %s18, [#allocation3]
    $region5: #{tpu_custom_call.1} parent=1 // pred_fallthru
      _
    // Predicated region
    $region6: #{tpu_custom_call.1} parent=1 // pred_check
      _
    $region7: #{tpu_custom_call.1} parent=1 // pred_check_branch
      %22 = sbr.rel (0) target = $region9
    $region8: #{tpu_custom_call.1} parent=1 // pred_region
      %s24 = ssub.s32 2048, 2048
      %25 = vsyncadd [#allocation6], %s24
      %s26 = sshll.u32 [#allocation5], 4
      %s27 = int_to_ptr.vmem [resolvable:$true] %s26
      %32 = dma.hbm_to_vmem [thread:$0]  %s1, 2048, %s27, [#allocation6], 128, 128, 8
    $region9: #{tpu_custom_call.1} parent=1 // pred_fallthru
      _
    // Predicated region
    $region10: #{tpu_custom_call.1} parent=1 // pred_check
      _
    $region11: #{tpu_custom_call.1} parent=1 // pred_check_branch
      %34 = sbr.rel (0) target = $region13
    $region12: #{tpu_custom_call.1} parent=1 // pred_region
      _
    $region13: #{tpu_custom_call.1} parent=1 // pred_fallthru
      _
    // Predicated region
    $region14: #{tpu_custom_call.1} parent=1 // pred_check
      _
    $region15: #{tpu_custom_call.1} parent=1 // pred_check_branch
      %36 = sbr.rel (0) target = $region17
    $region16: #{tpu_custom_call.1} parent=1 // pred_region
      %37 = dma.done [#allocation3], 128
    $region17: #{tpu_custom_call.1} parent=1 // pred_fallthru
      _
    // Predicated region
    $region18: #{tpu_custom_call.1} parent=1 // pred_check
      _
    $region19: #{tpu_custom_call.1} parent=1 // pred_check_branch
      %39 = sbr.rel (0) target = $region21
    $region20: #{tpu_custom_call.1} parent=1 // pred_region
      %40 = dma.done [#allocation6], 2048
    $region21: #{tpu_custom_call.1} parent=1 // pred_fallthru
      _
    %v41 = vld [vmem:[#allocation2] sm:$0xff]
    %v42 = vld [vmem:[#allocation5] sm:$0xff]
    %v43 = vld [vmem:[#allocation5 + $0x8] sm:$0xff]
    %v44 = vld [vmem:[#allocation5 + $0x10] sm:$0xff]
    %v45 = vld [vmem:[#allocation5 + $0x18] sm:$0xff]
    %v46 = vld [vmem:[#allocation5 + $0x20] sm:$0xff]
    %v47 = vld [vmem:[#allocation5 + $0x28] sm:$0xff]
    %v48 = vld [vmem:[#allocation5 + $0x30] sm:$0xff]
    %v49 = vld [vmem:[#allocation5 + $0x38] sm:$0xff]
    %v50 = vld [vmem:[#allocation5 + $0x40] sm:$0xff]
    %v51 = vld [vmem:[#allocation5 + $0x48] sm:$0xff]
    %v52 = vld [vmem:[#allocation5 + $0x50] sm:$0xff]
    %v53 = vld [vmem:[#allocation5 + $0x58] sm:$0xff]
    %v54 = vld [vmem:[#allocation5 + $0x60] sm:$0xff]
    %v55 = vld [vmem:[#allocation5 + $0x68] sm:$0xff]
    %v56 = vld [vmem:[#allocation5 + $0x70] sm:$0xff]
    %v57 = vld [vmem:[#allocation5 + $0x78] sm:$0xff]
    %v58 = vld [vmem:[%s2] sm:$0x1]
    %v60 = vlaneseq
    %v61 = vshrl.u32 %v60, 7
    %v62 = vsub.s32 0, %v61
    %v63 = vrot.slane %v58, %v62
    %65 = vmatprep.subr.mxu0 0.0
    %66 = vmatpush1.msra.mxu0 %v42
    %67 = vmatprep.subr.mxu0 0.0
    %68 = vmatpush1.msra.mxu0 %v43
    %69 = vmatprep.subr.mxu0 0.0
    %70 = vmatpush1.msra.mxu0 %v44
    %71 = vmatprep.subr.mxu0 0.0
    %72 = vmatpush1.msra.mxu0 %v45
    %73 = vmatprep.subr.mxu0 0.0
    %74 = vmatpush1.msra.mxu0 %v46
    %75 = vmatprep.subr.mxu0 0.0
    %76 = vmatpush1.msra.mxu0 %v47
    %77 = vmatprep.subr.mxu0 0.0
    %78 = vmatpush1.msra.mxu0 %v48
    %79 = vmatprep.subr.mxu0 0.0
    %80 = vmatpush1.msra.mxu0 %v49
    %81 = vmatprep.subr.mxu0 0.0
    %82 = vmatpush1.msra.mxu0 %v50
    %83 = vmatprep.subr.mxu0 0.0
    %84 = vmatpush1.msra.mxu0 %v51
    %85 = vmatprep.subr.mxu0 0.0
    %86 = vmatpush1.msra.mxu0 %v52
    %87 = vmatprep.subr.mxu0 0.0
    %88 = vmatpush1.msra.mxu0 %v53
    %89 = vmatprep.subr.mxu0 0.0
    %90 = vmatpush1.msra.mxu0 %v54
    %91 = vmatprep.subr.mxu0 0.0
    %92 = vmatpush1.msra.mxu0 %v55
    %93 = vmatprep.subr.mxu0 0.0
    %94 = vmatpush1.msra.mxu0 %v56
    %95 = vmatprep.subr.mxu0 0.0
    %96 = vmatpush1.msra.mxu0 %v57
    %97 = vmatprep.subr.mxu0 0.0
    %98 = vmatpush1.msra.mxu0 0.0
    %99 = vmatprep.subr.mxu0 0.0
    %100 = vmatpush1.msra.mxu0 0.0
    %101 = vmatprep.subr.mxu0 0.0
    %102 = vmatpush1.msra.mxu0 0.0
    %103 = vmatprep.subr.mxu0 0.0
    %104 = vmatpush1.msra.mxu0 0.0
    %105 = vmatprep.subr.mxu0 0.0
    %106 = vmatpush1.msra.mxu0 0.0
    %107 = vmatprep.subr.mxu0 0.0
    %108 = vmatpush1.msra.mxu0 0.0
    %109 = vmatprep.subr.mxu0 0.0
    %110 = vmatpush1.msra.mxu0 0.0
    %111 = vmatprep.subr.mxu0 0.0
    %112 = vmatpush1.msra.mxu0 0.0
    %113 = vmatprep.subr.mxu0 0.0
    %114 = vmatpush1.msra.mxu0 0.0
    %115 = vmatprep.subr.mxu0 0.0
    %116 = vmatpush1.msra.mxu0 0.0
    %117 = vmatprep.subr.mxu0 0.0
    %118 = vmatpush1.msra.mxu0 0.0
    %119 = vmatprep.subr.mxu0 0.0
    %120 = vmatpush1.msra.mxu0 0.0
    %121 = vmatprep.subr.mxu0 0.0
    %122 = vmatpush1.msra.mxu0 0.0
    %123 = vmatprep.subr.mxu0 0.0
    %124 = vmatpush1.msra.mxu0 0.0
    %125 = vmatprep.subr.mxu0 0.0
    %126 = vmatpush1.msra.mxu0 0.0
    %127 = vmatprep.subr.mxu0 0.0
    %128 = vmatpush1.msra.mxu0 0.0
    %129 = vmatprep.mubr.f32.mxu0 0.0
    %130 = vmatmul.mubr.f32.gmra.mrb[0].mxu0 %v41
    %v131 = vpop.f32.mrb[0].mxu0
    %v132 = vadd.f32 %v63, %v131
    %v133 = vpop.f32.mrb[0].mxu0
    %134 = vdwg.mxu0
    %135 = vst [vmem:[#allocation7] sm:$0xff] %v132
    // Predicated region
    $region22: #{tpu_custom_call.1} parent=1 // pred_check
      _
    $region23: #{tpu_custom_call.1} parent=1 // pred_check_branch
      %137 = sbr.rel (0) target = $region25
    $region24: #{tpu_custom_call.1} parent=1 // pred_region
      %s139 = ssub.s32 128, 128
      %140 = vsyncadd [#allocation4], %s139
      %s142 = sshll.u32 [#allocation7], 4
      %s143 = int_to_ptr.vmem [resolvable:$true] %s142
      %145 = dma.vmem_to_hbm [thread:$0]  %s143, 128, %s3, [#allocation4]
    $region25: #{tpu_custom_call.1} parent=1 // pred_fallthru
      _
    // Predicated region
    $region26: #{tpu_custom_call.1} parent=1 // pred_check
      _
    $region27: #{tpu_custom_call.1} parent=1 // pred_check_branch
      %147 = sbr.rel (0) target = $region29
    $region28: #{tpu_custom_call.1} parent=1 // pred_region
      %148 = dma.done [#allocation4], 128
    $region29: #{tpu_custom_call.1} parent=1 // pred_fallthru
      _
    %149 = vsyncpa [#allocation3], 1
    %150 = vsyncpa [#allocation6], 1
    %151 = vsyncpa [#allocation4], 1

</llo_original>
